<compile_context>
chip_gen: v7x
topology: tpu7x:2x2x1
jax: 0.10.0
libtpu: 0.0.40
codegen_flags: <defaults>
</compile_context>

<pallas_src>
import functools

import jax
import jax.numpy as jnp
from jax import lax
from jax.experimental import pallas as pl
from jax.experimental.pallas import tpu as pltpu

LAMBDA_PARAM = 0.005   # default lambda_param from BarlowTwinsLoss.__init__
BN_EPS = 1e-5          # F.batch_norm default eps

_LANE_TILE_CANDIDATES = (1024, 512, 256, 128)                    # feature tiles
_SUBLANE_TILE_CANDIDATES = (1024, 512, 256, 128, 64, 32, 16, 8)  # batch tiles


def _pick_tile(dim, candidates):
    for c in candidates:
        if c <= dim and dim % c == 0:
            return c
    return dim  # small / odd dims: use the full extent (allowed by BlockSpec rules)


def _vmem_limit(est_bytes):
    # ~2x margin over the estimated working set, capped at 48 MiB (v7x only
    # has 64 MiB of physical VMEM; never request all of it).
    return int(min(max(2 * est_bytes, 8 * 1024 * 1024), 48 * 1024 * 1024))


# --------------------------------------------------------------------------
# Pass 1: joint batch-norm statistics (mean, 1/std) over the 2N stacked rows
#         + bf16 copies of the inputs for the MXU pass.
# --------------------------------------------------------------------------
def _bn_stats_kernel(za_ref, zb_ref, mean_ref, istd_ref, za16_ref, zb16_ref,
                     sum_sc, sq_sc, *, inv_two_n):
    # program_id / num_programs only at kernel top level (never inside pl.when).
    k = pl.program_id(1)
    is_first = k == 0
    is_last = k == pl.num_programs(1) - 1

    @pl.when(is_first)
    def _():
        sum_sc[...] = jnp.zeros_like(sum_sc)
        sq_sc[...] = jnp.zeros_like(sq_sc)

    za = za_ref[...].astype(jnp.float32)
    zb = zb_ref[...].astype(jnp.float32)
    # bf16 copies ride pass 1's existing read stream.
    za16_ref[...] = za.astype(jnp.bfloat16)
    zb16_ref[...] = zb.astype(jnp.bfloat16)
    sum_sc[...] += (jnp.sum(za, axis=0, keepdims=True)
                    + jnp.sum(zb, axis=0, keepdims=True))
    sq_sc[...] += (jnp.sum(za * za, axis=0, keepdims=True)
                   + jnp.sum(zb * zb, axis=0, keepdims=True))

    @pl.when(is_last)
    def _():
        mean = sum_sc[...] * inv_two_n
        # Single-pass variance; clamp >= 0 against cancellation.
        var = jnp.maximum(sq_sc[...] * inv_two_n - mean * mean, 0.0)
        mean_ref[...] = mean
        istd_ref[...] = lax.rsqrt(var + BN_EPS)


def _bn_stats(z_a, z_b, *, block_d, block_k):
    n, d = z_a.shape
    td, tk = block_d, block_k
    assert d % td == 0 and n % tk == 0, (n, d, tk, td)
    grid = (d // td, n // tk)
    kernel = functools.partial(_bn_stats_kernel, inv_two_n=1.0 / (2.0 * n))
    est = (2 * 2 * tk * td * 4      # double-buffered f32 input tiles
           + 2 * 2 * tk * td * 2    # double-buffered bf16 output tiles
           + 8 * td * 4)            # stats out blocks + scratch
    return pl.pallas_call(
        kernel,
        out_shape=(jax.ShapeDtypeStruct((1, d), jnp.float32),
                   jax.ShapeDtypeStruct((1, d), jnp.float32),
                   jax.ShapeDtypeStruct((n, d), jnp.bfloat16),
                   jax.ShapeDtypeStruct((n, d), jnp.bfloat16)),
        grid=grid,
        in_specs=[pl.BlockSpec((tk, td), lambda j, k: (k, j)),
                  pl.BlockSpec((tk, td), lambda j, k: (k, j))],
        out_specs=(pl.BlockSpec((1, td), lambda j, k: (0, j)),
                   pl.BlockSpec((1, td), lambda j, k: (0, j)),
                   pl.BlockSpec((tk, td), lambda j, k: (k, j)),
                   pl.BlockSpec((tk, td), lambda j, k: (k, j))),
        scratch_shapes=[pltpu.VMEM((1, td), jnp.float32),
                        pltpu.VMEM((1, td), jnp.float32)],
        compiler_params=pltpu.CompilerParams(
            dimension_semantics=("parallel", "arbitrary"),
            vmem_limit_bytes=_vmem_limit(est)),
        cost_estimate=pl.CostEstimate(
            flops=6 * n * d, transcendentals=d,
            bytes_accessed=2 * n * d * 4 + 2 * n * d * 2 + 2 * d * 4),
    )(z_a, z_b)


# --------------------------------------------------------------------------
# Pass 2: tiled cross-correlation + per-tile loss partials.
# --------------------------------------------------------------------------
def _corr_loss_kernel(mean_i_ref, istd_i_ref, mean_j_ref, istd_j_ref,
                      za_ref, zb_ref, out_ref, acc_ref, *, inv_n, lambda_param):
    # program_id / num_programs only at kernel top level (never inside pl.when).
    i = pl.program_id(0)
    j = pl.program_id(1)
    k = pl.program_id(2)
    is_first = k == 0
    is_last = k == pl.num_programs(2) - 1
    is_diag_tile = i == j

    @pl.when(is_first)
    def _():
        acc_ref[...] = jnp.zeros_like(acc_ref)

    # Normalize bf16 tiles on the fly in f32 (VPU work, hidden under MXU
    # cycles); feed the MXU bf16 operands with f32 accumulation.
    za_n = (za_ref[...].astype(jnp.float32) - mean_i_ref[...]) * istd_i_ref[...]
    zb_n = (zb_ref[...].astype(jnp.float32) - mean_j_ref[...]) * istd_j_ref[...]
    acc_ref[...] += lax.dot_general(
        za_n.astype(jnp.bfloat16), zb_n.astype(jnp.bfloat16),
        dimension_numbers=(((0,), (0,)), ((), ())),   # za^T @ zb
        preferred_element_type=jnp.float32,
    )

    # Epilogue A: off-diagonal tiles (the vast majority) -> only sum(c*c),
    # no iota / mask work at all.
    @pl.when(jnp.logical_and(is_last, jnp.logical_not(is_diag_tile)))
    def _():
        c = acc_ref[...] * inv_n
        out_ref[0, 0, 0, 0] = lambda_param * jnp.sum(c * c)

    # Epilogue B: diagonal tiles (i == j) -> invariance / redundancy split
    # via a tile-local iota mask.
    @pl.when(jnp.logical_and(is_last, is_diag_tile))
    def _():
        c = acc_ref[...] * inv_n
        ti, tj = acc_ref.shape
        row = lax.broadcasted_iota(jnp.int32, (ti, tj), 0)
        col = lax.broadcasted_iota(jnp.int32, (ti, tj), 1)
        on_diag = row == col
        inv_term = jnp.sum(jnp.where(on_diag, (c - 1.0) * (c - 1.0), 0.0))
        red_term = jnp.sum(jnp.where(on_diag, 0.0, c * c))
        out_ref[0, 0, 0, 0] = inv_term + lambda_param * red_term


def _corr_loss_partials(za16, zb16, mean, istd, lambda_param, *, block_d, block_k):
    n, d = za16.shape
    ti = tj = block_d
    tk = block_k
    assert d % ti == 0 and n % tk == 0, (n, d, tk, ti)
    gi, gj, gk = d // ti, d // tj, n // tk
    kernel = functools.partial(_corr_loss_kernel,
                               inv_n=1.0 / n,
                               lambda_param=float(lambda_param))
    est = (2 * tk * (ti + tj) * 2     # double-buffered bf16 za/zb tiles
           + ti * tj * 4              # f32 accumulator scratch
           + ti * tj * 4              # epilogue transients (c, c*c, masks)
           + 8 * (ti + tj) * 4)       # mean/istd tiles (double-buffered)
    return pl.pallas_call(
        kernel,
        out_shape=jax.ShapeDtypeStruct((gi, gj, 1, 1), jnp.float32),
        grid=(gi, gj, gk),
        in_specs=[
            pl.BlockSpec((1, ti), lambda i, j, k: (0, i)),   # mean for rows (i)
            pl.BlockSpec((1, ti), lambda i, j, k: (0, i)),   # inv_std for rows
            pl.BlockSpec((1, tj), lambda i, j, k: (0, j)),   # mean for cols (j)
            pl.BlockSpec((1, tj), lambda i, j, k: (0, j)),   # inv_std for cols
            pl.BlockSpec((tk, ti), lambda i, j, k: (k, i)),  # z_a bf16 tile
            pl.BlockSpec((tk, tj), lambda i, j, k: (k, j)),  # z_b bf16 tile
        ],
        out_specs=pl.BlockSpec((1, 1, 1, 1), lambda i, j, k: (i, j, 0, 0)),
        scratch_shapes=[pltpu.VMEM((ti, tj), jnp.float32)],
        compiler_params=pltpu.CompilerParams(
            dimension_semantics=("parallel", "parallel", "arbitrary"),
            vmem_limit_bytes=_vmem_limit(est)),
        cost_estimate=pl.CostEstimate(
            flops=2 * n * d * d, transcendentals=0,
            bytes_accessed=n * d * 2 * (gi + gj) + gi * gj * 4),
    )(mean, istd, mean, istd, za16, zb16)


def barlow_twins_loss(z_a: jax.Array, z_b: jax.Array,
                      lambda_param: float = LAMBDA_PARAM,
                      *, block_d: int | None = None,
                      block_k: int | None = None) -> jax.Array:
    assert z_a.shape == z_b.shape and z_a.ndim == 2, (z_a.shape, z_b.shape)
    n, d = z_a.shape
    z_a = z_a.astype(jnp.float32)
    z_b = z_b.astype(jnp.float32)

    td = block_d if block_d is not None else _pick_tile(d, _LANE_TILE_CANDIDATES)

    # Pass 1: one HBM sweep -> joint BN stats + bf16 copies of the inputs.
    if block_k is not None:
        tk1 = block_k
    else:
        tk1 = n if n <= 512 else _pick_tile(n, (512, 256, 128, 64, 32, 16, 8))
    mean, istd, za16, zb16 = _bn_stats(z_a, z_b, block_d=td, block_k=tk1)

    # Pass 2: tiled normalized cross-correlation + per-tile partial losses.
    if block_k is not None:
        tk2 = block_k
    elif n <= 1024:
        tk2 = n            # single K step per output tile when operands fit VMEM
    else:
        tk2 = _pick_tile(n, _SUBLANE_TILE_CANDIDATES)
    partials = _corr_loss_partials(za16, zb16, mean, istd, lambda_param,
                                   block_d=td, block_k=tk2)
    # TODO(synk): distributed all-reduce of c (gather_distributed=True) not implemented.
    return jnp.sum(partials)


# --------------------------------------------------------------------------
# Pure-JAX reference mirroring the PyTorch forward pass.
# --------------------------------------------------------------------------
def _reference_loss(z_a, z_b, lambda_param=LAMBDA_PARAM):
    combined = jnp.concatenate([z_a, z_b], axis=0)            # [2N, D]
    mean = jnp.mean(combined, axis=0, keepdims=True)
    var = jnp.mean((combined - mean) ** 2, axis=0, keepdims=True)
    normed = (combined - mean) / jnp.sqrt(var + BN_EPS)
    n = z_a.shape[0]
    za_n, zb_n = normed[:n], normed[n:]
    c = (za_n.T @ zb_n) / n
    diag = jnp.diagonal(c)
    inv = jnp.sum((diag - 1.0) ** 2)
    red = jnp.sum(c * c) - jnp.sum(diag * diag)
    return inv + lambda_param * red


if __name__ == "__main__":
    key = jax.random.PRNGKey(0)

    # Case 1: small [batch, dim] shapes consistent with the module.
    ka, kb = jax.random.split(key)
    z_a = jax.random.normal(ka, (8, 32), dtype=jnp.float32)
    z_b = jax.random.normal(kb, (8, 32), dtype=jnp.float32)
    loss = barlow_twins_loss(z_a, z_b)
    jax.block_until_ready(loss)
    ref = _reference_loss(z_a, z_b)
    # bf16 MXU operands (f32 accumulation) -> slightly loose tolerance.
    assert jnp.allclose(loss, ref, rtol=5e-2, atol=5e-2), (loss, ref)

    # Case 2: exercise the multi-tile grid (2x2x2 in pass 2, 2x2 in pass 1).
    kc, kd = jax.random.split(kb)
    z_a2 = jax.random.normal(kc, (16, 256), dtype=jnp.float32)
    z_b2 = jax.random.normal(kd, (16, 256), dtype=jnp.float32)
    loss2 = barlow_twins_loss(z_a2, z_b2, block_d=128, block_k=8)
    jax.block_until_ready(loss2)
    ref2 = _reference_loss(z_a2, z_b2)
    assert jnp.allclose(loss2, ref2, rtol=5e-2, atol=5e-2), (loss2, ref2)

    print("KERNEL_OK")
</pallas_src>

<mosaic_0001>
module attributes {stable_mosaic.version = 11 : i64} {
  func.func @_bn_stats_kernel(%arg0: i32, %arg1: i32, %arg2: memref<8x32xf32, #tpu.memory_space<vmem>>, %arg3: memref<8x32xf32, #tpu.memory_space<vmem>>, %arg4: memref<1x32xf32, #tpu.memory_space<vmem>>, %arg5: memref<1x32xf32, #tpu.memory_space<vmem>>, %arg6: memref<8x32xbf16, #tpu.memory_space<vmem>>, %arg7: memref<8x32xbf16, #tpu.memory_space<vmem>>, %arg8: memref<1x32xf32, #tpu.memory_space<vmem>>, %arg9: memref<1x32xf32, #tpu.memory_space<vmem>>) attributes {dimension_semantics = [#tpu.dimension_semantics<parallel>, #tpu.dimension_semantics<arbitrary>], iteration_bounds = array<i64: 1, 1>, scalar_prefetch = 0 : i64, scratch_operands = 2 : i64, tpu.core_type = #tpu.core_type<tc>, window_params = [{transform_indices = @transform_0, window_bounds = array<i64: 8, 32>}, {transform_indices = @transform_1, window_bounds = array<i64: 8, 32>}, {transform_indices = @transform_2, window_bounds = array<i64: 1, 32>}, {transform_indices = @transform_3, window_bounds = array<i64: 1, 32>}, {transform_indices = @transform_4, window_bounds = array<i64: 8, 32>}, {transform_indices = @transform_5, window_bounds = array<i64: 8, 32>}]} {
    %c0_i32 = arith.constant 0 : i32
    %0 = arith.cmpi eq, %arg1, %c0_i32 : i32
    %c0_i32_0 = arith.constant 0 : i32
    %1 = arith.cmpi eq, %arg1, %c0_i32_0 : i32
    %2 = arith.extui %0 : i1 to i32
    %c0_i32_1 = arith.constant 0 : i32
    %3 = arith.cmpi ne, %2, %c0_i32_1 : i32
    scf.if %3 {
      %cst_21 = arith.constant 0.000000e+00 : f32
      %30 = vector.broadcast %cst_21 : f32 to vector<1x32xf32>
      %c0_22 = arith.constant 0 : index
      %c0_23 = arith.constant 0 : index
      %31 = vector.load %arg8[%c0_22, %c0_23] : memref<1x32xf32, #tpu.memory_space<vmem>>, vector<1x32xf32>
      tpu.vector_store %arg8[%c0_22, %c0_23], %30 {strides = array<i32>} : memref<1x32xf32, #tpu.memory_space<vmem>>, vector<1x32xf32>,
      %cst_24 = arith.constant 0.000000e+00 : f32
      %32 = vector.broadcast %cst_24 : f32 to vector<1x32xf32>
      %c0_25 = arith.constant 0 : index
      %c0_26 = arith.constant 0 : index
      %33 = vector.load %arg9[%c0_25, %c0_26] : memref<1x32xf32, #tpu.memory_space<vmem>>, vector<1x32xf32>
      tpu.vector_store %arg9[%c0_25, %c0_26], %32 {strides = array<i32>} : memref<1x32xf32, #tpu.memory_space<vmem>>, vector<1x32xf32>,
    } else {
    }
    %c0 = arith.constant 0 : index
    %c0_2 = arith.constant 0 : index
    %4 = vector.load %arg2[%c0, %c0_2] : memref<8x32xf32, #tpu.memory_space<vmem>>, vector<8x32xf32>
    %c0_3 = arith.constant 0 : index
    %c0_4 = arith.constant 0 : index
    %5 = vector.load %arg3[%c0_3, %c0_4] : memref<8x32xf32, #tpu.memory_space<vmem>>, vector<8x32xf32>
    %6 = arith.truncf %4 : vector<8x32xf32> to vector<8x32xbf16>
    %c0_5 = arith.constant 0 : index
    %c0_6 = arith.constant 0 : index
    %7 = vector.load %arg6[%c0_5, %c0_6] : memref<8x32xbf16, #tpu.memory_space<vmem>>, vector<8x32xbf16>
    tpu.vector_store %arg6[%c0_5, %c0_6], %6 {strides = array<i32>} : memref<8x32xbf16, #tpu.memory_space<vmem>>, vector<8x32xbf16>,
    %8 = arith.truncf %5 : vector<8x32xf32> to vector<8x32xbf16>
    %c0_7 = arith.constant 0 : index
    %c0_8 = arith.constant 0 : index
    %9 = vector.load %arg7[%c0_7, %c0_8] : memref<8x32xbf16, #tpu.memory_space<vmem>>, vector<8x32xbf16>
    tpu.vector_store %arg7[%c0_7, %c0_8], %8 {strides = array<i32>} : memref<8x32xbf16, #tpu.memory_space<vmem>>, vector<8x32xbf16>,
    %c0_9 = arith.constant 0 : index
    %c0_10 = arith.constant 0 : index
    %10 = vector.load %arg8[%c0_9, %c0_10] : memref<1x32xf32, #tpu.memory_space<vmem>>, vector<1x32xf32>
    %cst = arith.constant dense<0.000000e+00> : vector<32xf32>
    %11 = vector.multi_reduction <add>, %4, %cst [0] : vector<8x32xf32> to vector<32xf32>
    %12 = vector.shape_cast %11 : vector<32xf32> to vector<1x32xf32>
    %cst_11 = arith.constant dense<0.000000e+00> : vector<32xf32>
    %13 = vector.multi_reduction <add>, %5, %cst_11 [0] : vector<8x32xf32> to vector<32xf32>
    %14 = vector.shape_cast %13 : vector<32xf32> to vector<1x32xf32>
    %15 = arith.addf %12, %14 : vector<1x32xf32>
    %16 = arith.addf %10, %15 : vector<1x32xf32>
    %c0_12 = arith.constant 0 : index
    %c0_13 = arith.constant 0 : index
    %17 = vector.load %arg8[%c0_12, %c0_13] : memref<1x32xf32, #tpu.memory_space<vmem>>, vector<1x32xf32>
    tpu.vector_store %arg8[%c0_12, %c0_13], %16 {strides = array<i32>} : memref<1x32xf32, #tpu.memory_space<vmem>>, vector<1x32xf32>,
    %c0_14 = arith.constant 0 : index
    %c0_15 = arith.constant 0 : index
    %18 = vector.load %arg9[%c0_14, %c0_15] : memref<1x32xf32, #tpu.memory_space<vmem>>, vector<1x32xf32>
    %19 = arith.mulf %4, %4 : vector<8x32xf32>
    %cst_16 = arith.constant dense<0.000000e+00> : vector<32xf32>
    %20 = vector.multi_reduction <add>, %19, %cst_16 [0] : vector<8x32xf32> to vector<32xf32>
    %21 = vector.shape_cast %20 : vector<32xf32> to vector<1x32xf32>
    %22 = arith.mulf %5, %5 : vector<8x32xf32>
    %cst_17 = arith.constant dense<0.000000e+00> : vector<32xf32>
    %23 = vector.multi_reduction <add>, %22, %cst_17 [0] : vector<8x32xf32> to vector<32xf32>
    %24 = vector.shape_cast %23 : vector<32xf32> to vector<1x32xf32>
    %25 = arith.addf %21, %24 : vector<1x32xf32>
    %26 = arith.addf %18, %25 : vector<1x32xf32>
    %c0_18 = arith.constant 0 : index
    %c0_19 = arith.constant 0 : index
    %27 = vector.load %arg9[%c0_18, %c0_19] : memref<1x32xf32, #tpu.memory_space<vmem>>, vector<1x32xf32>
    tpu.vector_store %arg9[%c0_18, %c0_19], %26 {strides = array<i32>} : memref<1x32xf32, #tpu.memory_space<vmem>>, vector<1x32xf32>,
    %28 = arith.extui %1 : i1 to i32
    %c0_i32_20 = arith.constant 0 : i32
    %29 = arith.cmpi ne, %28, %c0_i32_20 : i32
    scf.if %29 {
      %c0_21 = arith.constant 0 : index
      %c0_22 = arith.constant 0 : index
      %30 = vector.load %arg8[%c0_21, %c0_22] : memref<1x32xf32, #tpu.memory_space<vmem>>, vector<1x32xf32>
      %cst_23 = arith.constant 6.250000e-02 : f32
      %31 = vector.broadcast %cst_23 : f32 to vector<1x32xf32>
      %32 = arith.mulf %30, %31 : vector<1x32xf32>
      %c0_24 = arith.constant 0 : index
      %c0_25 = arith.constant 0 : index
      %33 = vector.load %arg9[%c0_24, %c0_25] : memref<1x32xf32, #tpu.memory_space<vmem>>, vector<1x32xf32>
      %cst_26 = arith.constant 6.250000e-02 : f32
      %34 = vector.broadcast %cst_26 : f32 to vector<1x32xf32>
      %35 = arith.mulf %33, %34 : vector<1x32xf32>
      %36 = arith.mulf %32, %32 : vector<1x32xf32>
      %37 = arith.subf %35, %36 : vector<1x32xf32>
      %cst_27 = arith.constant 0.000000e+00 : f32
      %38 = vector.broadcast %cst_27 : f32 to vector<1x32xf32>
      %39 = arith.maximumf %37, %38 : vector<1x32xf32>
      %c0_28 = arith.constant 0 : index
      %c0_29 = arith.constant 0 : index
      %40 = vector.load %arg4[%c0_28, %c0_29] : memref<1x32xf32, #tpu.memory_space<vmem>>, vector<1x32xf32>
      tpu.vector_store %arg4[%c0_28, %c0_29], %32 {strides = array<i32>} : memref<1x32xf32, #tpu.memory_space<vmem>>, vector<1x32xf32>,
      %cst_30 = arith.constant 9.99999974E-6 : f32
      %41 = vector.broadcast %cst_30 : f32 to vector<1x32xf32>
      %42 = arith.addf %39, %41 : vector<1x32xf32>
      %43 = math.rsqrt %42 : vector<1x32xf32>
      %c0_31 = arith.constant 0 : index
      %c0_32 = arith.constant 0 : index
      %44 = vector.load %arg5[%c0_31, %c0_32] : memref<1x32xf32, #tpu.memory_space<vmem>>, vector<1x32xf32>
      tpu.vector_store %arg5[%c0_31, %c0_32], %43 {strides = array<i32>} : memref<1x32xf32, #tpu.memory_space<vmem>>, vector<1x32xf32>,
    } else {
    }
    return
  }
  func.func @transform_0(%arg0: i32, %arg1: i32) -> (i32, i32) {
    %c0_i32 = arith.constant 0 : i32
    return %arg1, %arg0 : i32, i32
  }
  func.func @transform_1(%arg0: i32, %arg1: i32) -> (i32, i32) {
    %c0_i32 = arith.constant 0 : i32
    return %arg1, %arg0 : i32, i32
  }
  func.func @transform_2(%arg0: i32, %arg1: i32) -> (i32, i32) {
    %c0_i32 = arith.constant 0 : i32
    %c0_i32_0 = arith.constant 0 : i32
    return %c0_i32, %arg0 : i32, i32
  }
  func.func @transform_3(%arg0: i32, %arg1: i32) -> (i32, i32) {
    %c0_i32 = arith.constant 0 : i32
    %c0_i32_0 = arith.constant 0 : i32
    return %c0_i32, %arg0 : i32, i32
  }
  func.func @transform_4(%arg0: i32, %arg1: i32) -> (i32, i32) {
    %c0_i32 = arith.constant 0 : i32
    return %arg1, %arg0 : i32, i32
  }
  func.func @transform_5(%arg0: i32, %arg1: i32) -> (i32, i32) {
    %c0_i32 = arith.constant 0 : i32
    return %arg1, %arg0 : i32, i32
  }
}

</mosaic_0001>

<llo_original>
// kernel: tpu_custom_call.1
$region0: #{tpu_custom_call.1}
  #allocation0 [shape = 'u32[]', space=smem, size = 0x4, offset = 0x4, fixed_abs, tag = 'smem constant byte address 0x4 - core index']
  #allocation1 [shape = 'u32[144,128]{1,0:T(1,128)}', space=vmem, size = 0x12000, scoped, tag = 'internal scratch']
  #allocation2 [shape = 'f32[1,32]{1,0:T(1,128)}', space=vmem, size = 0x200, scoped, tag = 'scratch operand']
  #allocation3 [shape = 'f32[1,32]{1,0:T(1,128)}', space=vmem, size = 0x200, scoped, tag = 'scratch operand']
  %s0 = inlined_call_operand.hbm [shape: f32[8,32], index: 0, kind: input, shape index: {}]
  %s1 = inlined_call_operand.hbm [shape: f32[8,32], index: 1, kind: input, shape index: {}]
  %s2 = inlined_call_operand.hbm [shape: f32[1,32], index: 2, kind: output, shape index: {0}]
  %s3 = inlined_call_operand.hbm [shape: f32[1,32], index: 3, kind: output, shape index: {1}]
  %s4 = inlined_call_operand.hbm [shape: bf16[8,32], index: 4, kind: output, shape index: {2}]
  %s5 = inlined_call_operand.hbm [shape: bf16[8,32], index: 5, kind: output, shape index: {3}]
  %6 = xla_tuple %s2, %s3, %s4, %s5
  %s7 = sld [smem:[#allocation0]]
  $region58: #{tpu_custom_call.1} parent=0
    _
  %s9 = ssub.s32 1, %s7
  %s10 = scalar_select 0, %s9, %s7
  $region1: #{tpu_custom_call.1} parent=0
    #allocation4 [shape = 'u8[4096]{0}', space=vmem, size = 0x1000, scoped, tag = 'input window, operand 0, single buffered']
    #allocation5 [shape = 's32[1]{0}', space=sflag, size = 0x4, scoped, tag = 'scoped memory for tpu_custom_call.1']
    #allocation6 [shape = 's32[1]{0}', space=sflag, size = 0x4, scoped, tag = 'scoped memory for tpu_custom_call.1']
    #allocation7 [shape = 'u8[4096]{0}', space=vmem, size = 0x1000, scoped, tag = 'input window, operand 1, single buffered']
    #allocation8 [shape = 's32[1]{0}', space=sflag, size = 0x4, scoped, tag = 'scoped memory for tpu_custom_call.1']
    #allocation9 [shape = 'u8[512]{0}', space=vmem, size = 0x400, scoped, tag = 'output window, operand 0, single buffered']
    #allocation10 [shape = 'u8[512]{0}', space=vmem, size = 0x400, scoped, tag = 'output window, operand 1, single buffered']
    #allocation11 [shape = 's32[1]{0}', space=sflag, size = 0x4, scoped, tag = 'scoped memory for tpu_custom_call.1']
    #allocation12 [shape = 'u8[2048]{0}', space=vmem, size = 0x800, scoped, tag = 'output window, operand 2, single buffered']
    #allocation13 [shape = 'u8[2048]{0}', space=vmem, size = 0x800, scoped, tag = 'output window, operand 3, single buffered']
    #allocation14 [shape = 's32[1]{0}', space=sflag, size = 0x4, scoped, tag = 'scoped memory for tpu_custom_call.1']
    %11 = vsyncpa [#allocation5], 0
    %12 = vsyncpa [#allocation8], 0
    %13 = vsyncpa [#allocation6], 0
    %14 = vsyncpa [#allocation11], 0
    %15 = vsyncpa [#allocation14], 0
    // Predicated region
    $region2: #{tpu_custom_call.1} parent=1 // pred_check
      _
    $region3: #{tpu_custom_call.1} parent=1 // pred_check_branch
      %17 = sbr.rel (0) target = $region5
    $region4: #{tpu_custom_call.1} parent=1 // pred_region
      %s19 = ssub.s32 128, 128
      %20 = vsyncadd [#allocation5], %s19
      %s22 = sshll.u32 [#allocation4], 4
      %s23 = int_to_ptr.vmem [resolvable:$true] %s22
      %25 = dma.hbm_to_vmem [thread:$0]  %s0, 128, %s23, [#allocation5]
    $region5: #{tpu_custom_call.1} parent=1 // pred_fallthru
      _
    // Predicated region
    $region6: #{tpu_custom_call.1} parent=1 // pred_check
      _
    $region7: #{tpu_custom_call.1} parent=1 // pred_check_branch
      %27 = sbr.rel (0) target = $region9
    $region8: #{tpu_custom_call.1} parent=1 // pred_region
      %s29 = ssub.s32 128, 128
      %30 = vsyncadd [#allocation8], %s29
      %s32 = sshll.u32 [#allocation7], 4
      %s33 = int_to_ptr.vmem [resolvable:$true] %s32
      %35 = dma.hbm_to_vmem [thread:$0]  %s1, 128, %s33, [#allocation8]
    $region9: #{tpu_custom_call.1} parent=1 // pred_fallthru
      _
    // Predicated region
    $region10: #{tpu_custom_call.1} parent=1 // pred_check
      _
    $region11: #{tpu_custom_call.1} parent=1 // pred_check_branch
      %37 = sbr.rel (0) target = $region13
    $region12: #{tpu_custom_call.1} parent=1 // pred_region
      %38 = dma.done [#allocation5], 128
    $region13: #{tpu_custom_call.1} parent=1 // pred_fallthru
      _
    // Predicated region
    $region14: #{tpu_custom_call.1} parent=1 // pred_check
      _
    $region15: #{tpu_custom_call.1} parent=1 // pred_check_branch
      %40 = sbr.rel (0) target = $region17
    $region16: #{tpu_custom_call.1} parent=1 // pred_region
      %41 = dma.done [#allocation8], 128
    $region17: #{tpu_custom_call.1} parent=1 // pred_fallthru
      _
    %p42 = scmp.eq.s32.totalorder 0, 0
    // Predicated region
    $region18: #{tpu_custom_call.1} parent=1 // pred_check
      %p43 = pneg %p42
    $region19: #{tpu_custom_call.1} parent=1 // pred_check_branch
      %45 = sbr.rel (%p43) target = $region21
    $region20: #{tpu_custom_call.1} parent=1 // pred_region
      %vm46 = vcmask 253952
      %47 = vst.msk [vmem:[#allocation2] sm:$0x1] %vm46, 0.0
      %48 = vst.msk [vmem:[#allocation3] sm:$0x1] %vm46, 0.0
    $region21: #{tpu_custom_call.1} parent=1 // pred_fallthru
      _
    %v49 = vld [vmem:[#allocation4] sm:$0xff]
    %v50 = vld [vmem:[#allocation7] sm:$0xff]
    %v51 = vpack.c.bf16 %v49, %v49
    %vm52 = vcmask 257024
    %53 = vst.msk [vmem:[#allocation12] sm:$0xf] %vm52, %v51
    %v54 = vpack.c.bf16 %v50, %v50
    %55 = vst.msk [vmem:[#allocation13] sm:$0xf] %vm52, %v54
    %v56 = vld [vmem:[#allocation2] sm:$0x1]
    %vm57 = vcmask 261120
    %v58 = vsel %vm57, %v49, 0.0
    %v59 = vrot.slane %v58, 4
    %v60 = vadd.f32 %v58, %v59
    %v61 = vrot.slane %v60, 2
    %v62 = vadd.f32 %v60, %v61
    %v63 = vrot.slane %v62, 1
    %v64 = vadd.f32 %v62, %v63
    %v65 = vsel %vm57, %v50, 0.0
    %v66 = vrot.slane %v65, 4
    %v67 = vadd.f32 %v65, %v66
    %v68 = vrot.slane %v67, 2
    %v69 = vadd.f32 %v67, %v68
    %v70 = vrot.slane %v69, 1
    %v71 = vadd.f32 %v69, %v70
    %v72 = vadd.f32 %v64, %v71
    %v73 = vadd.f32 %v56, %v72
    %vm74 = vcmask 253952
    %75 = vst.msk [vmem:[#allocation2] sm:$0x1] %vm74, %v73
    %v76 = vld [vmem:[#allocation3] sm:$0x1]
    %v77 = vmul.f32 %v49, %v49
    %v78 = vsel %vm57, %v77, 0.0
    %v79 = vrot.slane %v78, 4
    %v80 = vadd.f32 %v78, %v79
    %v81 = vrot.slane %v80, 2
    %v82 = vadd.f32 %v80, %v81
    %v83 = vrot.slane %v82, 1
    %v84 = vadd.f32 %v82, %v83
    %v85 = vmul.f32 %v50, %v50
    %v86 = vsel %vm57, %v85, 0.0
    %v87 = vrot.slane %v86, 4
    %v88 = vadd.f32 %v86, %v87
    %v89 = vrot.slane %v88, 2
    %v90 = vadd.f32 %v88, %v89
    %v91 = vrot.slane %v90, 1
    %v92 = vadd.f32 %v90, %v91
    %v93 = vadd.f32 %v84, %v92
    %v94 = vadd.f32 %v76, %v93
    %95 = vst.msk [vmem:[#allocation3] sm:$0x1] %vm74, %v94
    // Predicated region
    $region22: #{tpu_custom_call.1} parent=1 // pred_check
      %p96 = pneg %p42
    $region23: #{tpu_custom_call.1} parent=1 // pred_check_branch
      %98 = sbr.rel (%p96) target = $region25
    $region24: #{tpu_custom_call.1} parent=1 // pred_region
      %v99 = vld [vmem:[#allocation2] sm:$0x1]
      %v100 = vmul.f32 %v99, 0.0625
      %v101 = vld [vmem:[#allocation3] sm:$0x1]
      %v102 = vmul.f32 %v101, 0.0625
      %v103 = vmul.f32 %v100, %v100
      %v104 = vsub.f32 %v102, %v103
      %v105 = vmax.f32 %v104, 0.0
      %106 = vst.msk [vmem:[#allocation9] sm:$0x1] %vm74, %v100
      %v107 = vadd.f32 %v105, 1e-05
      %v108 = vrsqrt.pop %v107
      %109 = vst.msk [vmem:[#allocation10] sm:$0x1] %vm74, %v108
    $region25: #{tpu_custom_call.1} parent=1 // pred_fallthru
      _
    // Predicated region
    $region26: #{tpu_custom_call.1} parent=1 // pred_check
      _
    $region27: #{tpu_custom_call.1} parent=1 // pred_check_branch
      %111 = sbr.rel (0) target = $region29
    $region28: #{tpu_custom_call.1} parent=1 // pred_region
      %s113 = ssub.s32 16, 16
      %114 = vsyncadd [#allocation6], %s113
      %s116 = sshll.u32 [#allocation9], 4
      %s117 = int_to_ptr.vmem [resolvable:$true] %s116
      %119 = dma.vmem_to_hbm [thread:$0]  %s117, 16, %s2, [#allocation6]
    $region29: #{tpu_custom_call.1} parent=1 // pred_fallthru
      _
    // Predicated region
    $region30: #{tpu_custom_call.1} parent=1 // pred_check
      _
    $region31: #{tpu_custom_call.1} parent=1 // pred_check_branch
      %121 = sbr.rel (0) target = $region33
    $region32: #{tpu_custom_call.1} parent=1 // pred_region
      %s123 = ssub.s32 16, 16
      %124 = vsyncadd [#allocation11], %s123
      %s126 = sshll.u32 [#allocation10], 4
      %s127 = int_to_ptr.vmem [resolvable:$true] %s126
      %129 = dma.vmem_to_hbm [thread:$0]  %s127, 16, %s3, [#allocation11]
    $region33: #{tpu_custom_call.1} parent=1 // pred_fallthru
      _
    // Predicated region
    $region34: #{tpu_custom_call.1} parent=1 // pred_check
      _
    $region35: #{tpu_custom_call.1} parent=1 // pred_check_branch
      %131 = sbr.rel (0) target = $region37
    $region36: #{tpu_custom_call.1} parent=1 // pred_region
      %s133 = ssub.s32 64, 64
      %134 = vsyncadd [#allocation11], %s133
      %s136 = sshll.u32 [#allocation12], 4
      %s137 = int_to_ptr.vmem [resolvable:$true] %s136
      %139 = dma.vmem_to_hbm [thread:$0]  %s137, 64, %s4, [#allocation11]
    $region37: #{tpu_custom_call.1} parent=1 // pred_fallthru
      _
    // Predicated region
    $region38: #{tpu_custom_call.1} parent=1 // pred_check
      _
    $region39: #{tpu_custom_call.1} parent=1 // pred_check_branch
      %141 = sbr.rel (0) target = $region41
    $region40: #{tpu_custom_call.1} parent=1 // pred_region
      %s143 = ssub.s32 64, 64
      %144 = vsyncadd [#allocation14], %s143
      %s146 = sshll.u32 [#allocation13], 4
      %s147 = int_to_ptr.vmem [resolvable:$true] %s146
      %149 = dma.vmem_to_hbm [thread:$0]  %s147, 64, %s5, [#allocation14]
    $region41: #{tpu_custom_call.1} parent=1 // pred_fallthru
      _
    // Predicated region
    $region42: #{tpu_custom_call.1} parent=1 // pred_check
      _
    $region43: #{tpu_custom_call.1} parent=1 // pred_check_branch
      %151 = sbr.rel (0) target = $region45
    $region44: #{tpu_custom_call.1} parent=1 // pred_region
      %152 = dma.done [#allocation6], 16
    $region45: #{tpu_custom_call.1} parent=1 // pred_fallthru
      _
    // Predicated region
    $region46: #{tpu_custom_call.1} parent=1 // pred_check
      _
    $region47: #{tpu_custom_call.1} parent=1 // pred_check_branch
      %154 = sbr.rel (0) target = $region49
    $region48: #{tpu_custom_call.1} parent=1 // pred_region
      %155 = dma.done [#allocation11], 16
    $region49: #{tpu_custom_call.1} parent=1 // pred_fallthru
      _
    // Predicated region
    $region50: #{tpu_custom_call.1} parent=1 // pred_check
      _
    $region51: #{tpu_custom_call.1} parent=1 // pred_check_branch
      %157 = sbr.rel (0) target = $region53
    $region52: #{tpu_custom_call.1} parent=1 // pred_region
      %158 = dma.done [#allocation11], 64
    $region53: #{tpu_custom_call.1} parent=1 // pred_fallthru
      _
    // Predicated region
    $region54: #{tpu_custom_call.1} parent=1 // pred_check
      _
    $region55: #{tpu_custom_call.1} parent=1 // pred_check_branch
      %160 = sbr.rel (0) target = $region57
    $region56: #{tpu_custom_call.1} parent=1 // pred_region
      %161 = dma.done [#allocation14], 64
    $region57: #{tpu_custom_call.1} parent=1 // pred_fallthru
      _
    %162 = vsyncpa [#allocation5], 1
    %163 = vsyncpa [#allocation8], 1
    %164 = vsyncpa [#allocation6], 1
    %165 = vsyncpa [#allocation11], 1
    %166 = vsyncpa [#allocation14], 1

</llo_original>
